<compile_context>
chip_gen: v5e
topology: v5e:2x2
jax: 0.10.0
libtpu: 0.0.40
codegen_flags: <defaults>
</compile_context>

<pallas_src>
import jax
import jax.numpy as jnp
from jax.experimental import pallas as pl
from jax.experimental.pallas import tpu as pltpu


def _pick_time_chunk(T, V, max_lanes=512):
    """Largest divisor Tc of T with Tc*V <= max_lanes (keeps M_k small & lane-dense)."""
    tc = 1
    for t in range(1, T + 1):
        if T % t == 0 and t * V <= max_lanes:
            tc = t
    return tc


def _pick_samples_per_step(N, per_sample_bytes, max_block_bytes=4 << 20):
    """Samples per grid step: amortize per-step overhead, keep >= 2 grid steps."""
    best = 1
    for b in range(1, N + 1):
        if N % b == 0 and N // b >= 2 and b * per_sample_bytes <= max_block_bytes:
            best = b
    return best


def stgcn_block(x, wg, bg, a_eff, s1, t1, wt, bt, s2, t2):
    """Pallas STGCNBlock forward (identity residual, stride 1, eval-mode BN).

    x: (N, C_in, T, V) float32 (NCTV).  Returns (N, C_out, T, V) bfloat16.
    """
    N, C_in, T, V = x.shape
    K = a_eff.shape[0]
    KT = wt.shape[0]
    C_out = wg.shape[0] // K
    assert C_in == C_out, "identity residual path requires C_in == C_out"
    # TODO(synk): stride>1 TCN and the 1x1-conv downsample residual used by some
    # stacked STGCN++ blocks are not expressed by this kernel.
    pad = (KT - 1) // 2
    TV = T * V
    f32, bf16 = jnp.float32, jnp.bfloat16

    Tc = _pick_time_chunk(T, V)
    TcV = Tc * V
    n_chunks = T // Tc
    # 128-lane-aligned interior offset for the padded TCN scratch.
    L = ((pad * V + 127) // 128) * 128 if pad > 0 else 0

    # ---- parameter glue (runs once per call, outside the hot kernel) ----
    # Block-diagonal lane-dense aggregation operators: M_k = kron(I_Tc, A_k).
    eye_tc = jnp.eye(Tc, dtype=f32)
    a_ops = jnp.stack([jnp.kron(eye_tc, a_eff[k]) for k in range(K)]).astype(bf16)  # (K, TcV, TcV)
    # Per-subset 1x1-conv weight with BN1 scale folded.
    wgk = (s1[None, :, None] * wg.reshape(K, C_out, C_in)).astype(bf16)             # (K, C_out, C_in)
    # 1x1-conv bias refolded exactly through A column sums (bias does not commute
    # with the aggregation), plus BN1 shift; shipped only as a Tc-chunk tile.
    colsum = jnp.sum(a_eff, axis=1)                                                  # (K, V)
    bias_vw = jnp.einsum('ko,kw->ow', bg.reshape(K, C_out), colsum)                  # (C_out, V)
    b1c = jnp.tile(s1[:, None] * bias_vw + t1[:, None], (1, Tc)).astype(f32)         # (C_out, TcV)
    # Temporal-conv weight per tap with BN2 scale folded; bias with BN2 shift.
    wtk = (s2[None, :, None] * wt).astype(bf16)                                      # (KT, C_out, C_out)
    b2c = (s2 * bt + t2).reshape(C_out, 1).astype(f32)

    # bf16, lane-dense (T*V) kernel boundary (halves boundary HBM traffic).
    x_l = x.reshape(N, C_in, TV).astype(bf16)

    B = _pick_samples_per_step(N, (C_in + C_out) * TV * 2)
    grid = (N // B,)

    def kernel(x_ref, a_ref, wg_ref, b1_ref, wt_ref, b2_ref, o_ref, zpad_ref):
        # Re-zero the temporal-padding slabs every step (cheap; keeps each
        # TensorCore's private scratch valid when the batch axis is split).
        if L > 0:
            zeros_pad = jnp.zeros((C_out, L), bf16)
            zpad_ref[:, :L] = zeros_pad
            zpad_ref[:, L + TV:] = zeros_pad

        b1v = b1_ref[...]                       # (C_out, TcV) f32
        b2v = b2_ref[...]                       # (C_out, 1)   f32

        for b in range(B):                      # static unroll over samples in this block
            xb = x_ref[b]                       # (C_in, TV) bf16

            # ---- unit_gcn: lane-dense block-diag aggregation + channel mix ----
            for c in range(n_chunks):
                off = c * TcV
                xc = xb[:, off:off + TcV]                                   # (C_in, TcV)
                z = b1v
                for k in range(K):
                    xa = jnp.dot(xc, a_ref[k],
                                 preferred_element_type=f32).astype(bf16)   # (C_in, TcV)
                    z = z + jnp.dot(wg_ref[k], xa, preferred_element_type=f32)
                z = jnp.maximum(z, 0.0)
                zpad_ref[:, L + off:L + off + TcV] = z.astype(bf16)

            # ---- unit_tcn: (KT,1) conv as KT accumulating dots over shifted
            # lane windows of the padded scratch (no materialized im2col).
            # Identity residual + folded bias seed the f32 accumulator.
            acc = b2v + xb.astype(f32)                                       # (C_out, TV)
            base = L - pad * V
            for dt in range(KT):
                win = zpad_ref[:, base + dt * V: base + dt * V + TV]         # (C_out, TV) bf16
                acc = acc + jnp.dot(wt_ref[dt], win, preferred_element_type=f32)

            o_ref[b] = jnp.maximum(acc, 0.0).astype(o_ref.dtype)

    # ---- VMEM budget: actual working set + headroom, capped for v7x ----
    blk_bytes = 2 * B * (C_in + C_out) * TV * 2                 # x/out blocks, double-buffered
    wgt_bytes = 2 * ((K * TcV * TcV + K * C_out * C_in + KT * C_out * C_out) * 2
                     + (C_out * TcV + C_out) * 4)
    scratch_bytes = C_out * (2 * L + TV) * 2
    interm_bytes = 8 * C_out * TV * 4 + 4 * C_in * TcV * 2
    ws = blk_bytes + wgt_bytes + scratch_bytes + interm_bytes
    vmem_limit = int(min(max(2 * ws, 16 << 20), 48 << 20))

    def full(arr):
        nd = arr.ndim
        return pl.BlockSpec(arr.shape, lambda n, _nd=nd: (0,) * _nd)

    out = pl.pallas_call(
        kernel,
        out_shape=jax.ShapeDtypeStruct((N, C_out, TV), bf16),
        grid=grid,
        in_specs=[
            pl.BlockSpec((B, C_in, TV), lambda n: (n, 0, 0)),
            full(a_ops), full(wgk), full(b1c), full(wtk), full(b2c),
        ],
        out_specs=pl.BlockSpec((B, C_out, TV), lambda n: (n, 0, 0)),
        scratch_shapes=[pltpu.VMEM((C_out, 2 * L + TV), bf16)],
        compiler_params=pltpu.CompilerParams(
            dimension_semantics=("parallel",),
            vmem_limit_bytes=vmem_limit),
    )(x_l, a_ops, wgk, b1c, wtk, b2c)
    return out.reshape(N, C_out, T, V)


def stgcn_block_reference(x, wg, bg, a_eff, s1, t1, wt, bt, s2, t2):
    """Pure-JAX f32 reference mirroring the PyTorch forward (eval mode)."""
    N, C_in, T, V = x.shape
    K = a_eff.shape[0]
    KT = wt.shape[0]
    C_out = wg.shape[0] // K
    pad = (KT - 1) // 2

    y = jnp.einsum('oc,nctv->notv', wg, x) + bg[None, :, None, None]
    y = y.reshape(N, K, C_out, T, V)
    z = jnp.einsum('nkctv,kvw->nctw', y, a_eff)
    z = z * s1[None, :, None, None] + t1[None, :, None, None]
    z = jnp.maximum(z, 0.0)
    zp = jnp.pad(z, ((0, 0), (0, 0), (pad, pad), (0, 0)))
    out = jnp.zeros((N, C_out, T, V), jnp.float32) + bt[None, :, None, None]
    for dt in range(KT):
        out = out + jnp.einsum('oi,nitv->notv', wt[dt], zp[:, :, dt:dt + T, :])
    out = out * s2[None, :, None, None] + t2[None, :, None, None]
    return jnp.maximum(out + x, 0.0)


if __name__ == "__main__":
    key = jax.random.PRNGKey(0)
    N, C, T, V, K, KT = 2, 4, 8, 16, 3, 9   # in_channels == out_channels, stride == 1
    ks = jax.random.split(key, 12)

    x = jax.random.normal(ks[0], (N, C, T, V), jnp.float32)

    # Adjacency: K subsets, row-normalized; PA = 1 (adaptive='importance' init).
    A_raw = jax.random.uniform(ks[1], (K, V, V), jnp.float32)
    A = A_raw / jnp.sum(A_raw, axis=-1, keepdims=True)
    PA = jnp.ones((K, V, V), jnp.float32)
    A_eff = A * PA

    # unit_gcn 1x1 conv: Conv2d(C, K*C, 1) weight/bias.
    wg = 0.2 * jax.random.normal(ks[2], (K * C, C), jnp.float32)
    bg = 0.1 * jax.random.normal(ks[3], (K * C,), jnp.float32)

    # GCN BatchNorm2d (eval mode) folded into per-channel scale/shift.
    g1 = 1.0 + 0.1 * jax.random.normal(ks[4], (C,), jnp.float32)
    b1 = 0.1 * jax.random.normal(ks[5], (C,), jnp.float32)
    m1 = 0.1 * jax.random.normal(ks[6], (C,), jnp.float32)
    v1 = 1.0 + jnp.abs(jax.random.normal(ks[7], (C,), jnp.float32))
    s1 = g1 / jnp.sqrt(v1 + 1e-5)
    t1 = b1 - m1 * s1

    # unit_tcn: Conv2d(C, C, (9,1), padding=(4,0), stride=(1,1)) weight/bias.
    wt = 0.1 * jax.random.normal(ks[8], (KT, C, C), jnp.float32)
    bt = 0.1 * jax.random.normal(ks[9], (C,), jnp.float32)

    # TCN BatchNorm2d (eval mode) folded.
    g2 = 1.0 + 0.1 * jax.random.normal(ks[10], (C,), jnp.float32)
    b2 = 0.05 * jnp.arange(C, dtype=jnp.float32)
    m2 = jnp.zeros((C,), jnp.float32)
    v2 = jnp.ones((C,), jnp.float32)
    s2 = g2 / jnp.sqrt(v2 + 1e-5)
    t2 = b2 - m2 * s2
    # TODO(synk): nn.Dropout(0) and train-mode BatchNorm batch statistics are not
    # modeled; BN is applied in eval mode with folded scale/shift.

    out = stgcn_block(x, wg, bg, A_eff, s1, t1, wt, bt, s2, t2)
    out = jax.block_until_ready(out)

    ref = stgcn_block_reference(x, wg, bg, A_eff, s1, t1, wt, bt, s2, t2)
    assert out.shape == (N, C, T, V)
    out_f = out.astype(jnp.float32)
    err = float(jnp.max(jnp.abs(out_f - ref)))
    # Tolerance reflects bf16 boundary + bf16 MXU inputs (f32 accumulation) vs f32 ref.
    assert jnp.allclose(out_f, ref, rtol=5e-2, atol=5e-2), f"max |err| = {err}"
    print("KERNEL_OK")
</pallas_src>

<mosaic_0001>
module attributes {stable_mosaic.version = 11 : i64} {
  func.func @kernel(%arg0: i32, %arg1: memref<1x4x128xbf16, #tpu.memory_space<vmem>>, %arg2: memref<3x128x128xbf16, #tpu.memory_space<vmem>>, %arg3: memref<3x4x4xbf16, #tpu.memory_space<vmem>>, %arg4: memref<4x128xf32, #tpu.memory_space<vmem>>, %arg5: memref<9x4x4xbf16, #tpu.memory_space<vmem>>, %arg6: memref<4x1xf32, #tpu.memory_space<vmem>>, %arg7: memref<1x4x128xbf16, #tpu.memory_space<vmem>>, %arg8: memref<4x384xbf16, #tpu.memory_space<vmem>>) attributes {dimension_semantics = [#tpu.dimension_semantics<parallel>], iteration_bounds = array<i64: 2>, scalar_prefetch = 0 : i64, scratch_operands = 1 : i64, tpu.core_type = #tpu.core_type<tc>, window_params = [{transform_indices = @transform_0, window_bounds = array<i64: 1, 4, 128>}, {pipeline_mode = #tpu.pipeline_mode<synchronous>, transform_indices = @transform_1, window_bounds = array<i64: 3, 128, 128>}, {pipeline_mode = #tpu.pipeline_mode<synchronous>, transform_indices = @transform_2, window_bounds = array<i64: 3, 4, 4>}, {pipeline_mode = #tpu.pipeline_mode<synchronous>, transform_indices = @transform_3, window_bounds = array<i64: 4, 128>}, {pipeline_mode = #tpu.pipeline_mode<synchronous>, transform_indices = @transform_4, window_bounds = array<i64: 9, 4, 4>}, {pipeline_mode = #tpu.pipeline_mode<synchronous>, transform_indices = @transform_5, window_bounds = array<i64: 4, 1>}, {transform_indices = @transform_6, window_bounds = array<i64: 1, 4, 128>}]} {
    %cst = arith.constant 0.000000e+00 : bf16
    %0 = vector.broadcast %cst : bf16 to vector<4x128xbf16>
    %c0 = arith.constant 0 : index
    %c0_0 = arith.constant 0 : index
    %1 = vector.load %arg8[%c0, %c0_0] : memref<4x384xbf16, #tpu.memory_space<vmem>>, vector<4x128xbf16>
    tpu.vector_store %arg8[%c0, %c0_0], %0 {strides = array<i32>} : memref<4x384xbf16, #tpu.memory_space<vmem>>, vector<4x128xbf16>,
    %c0_1 = arith.constant 0 : index
    %c256 = arith.constant 256 : index
    %2 = vector.load %arg8[%c0_1, %c256] : memref<4x384xbf16, #tpu.memory_space<vmem>>, vector<4x128xbf16>
    tpu.vector_store %arg8[%c0_1, %c256], %0 {strides = array<i32>} : memref<4x384xbf16, #tpu.memory_space<vmem>>, vector<4x128xbf16>,
    %c0_2 = arith.constant 0 : index
    %c0_3 = arith.constant 0 : index
    %3 = vector.load %arg4[%c0_2, %c0_3] : memref<4x128xf32, #tpu.memory_space<vmem>>, vector<4x128xf32>
    %c0_4 = arith.constant 0 : index
    %c0_5 = arith.constant 0 : index
    %4 = vector.load %arg6[%c0_4, %c0_5] : memref<4x1xf32, #tpu.memory_space<vmem>>, vector<4x1xf32>
    %c0_6 = arith.constant 0 : index
    %c0_7 = arith.constant 0 : index
    %c0_8 = arith.constant 0 : index
    %5 = vector.load %arg1[%c0_6, %c0_7, %c0_8] : memref<1x4x128xbf16, #tpu.memory_space<vmem>>, vector<1x4x128xbf16>
    %6 = vector.shape_cast %5 : vector<1x4x128xbf16> to vector<4x128xbf16>
    %c0_9 = arith.constant 0 : index
    %c0_10 = arith.constant 0 : index
    %c0_11 = arith.constant 0 : index
    %7 = vector.load %arg2[%c0_9, %c0_10, %c0_11] : memref<3x128x128xbf16, #tpu.memory_space<vmem>>, vector<1x128x128xbf16>
    %8 = vector.shape_cast %7 : vector<1x128x128xbf16> to vector<128x128xbf16>
    %cst_12 = arith.constant dense<0.000000e+00> : vector<4x128xf32>
    %9 = tpu.matmul %6, %8, %cst_12 {dimension_numbers = #tpu.dot_dimension_numbers<[1], [0], [0], [1], [0, 0, 1, 1], [], []>} : vector<4x128xbf16>, vector<128x128xbf16>, vector<4x128xf32> -> vector<4x128xf32>
    %10 = arith.truncf %9 : vector<4x128xf32> to vector<4x128xbf16>
    %c0_13 = arith.constant 0 : index
    %c0_14 = arith.constant 0 : index
    %c0_15 = arith.constant 0 : index
    %11 = vector.load %arg3[%c0_13, %c0_14, %c0_15] : memref<3x4x4xbf16, #tpu.memory_space<vmem>>, vector<1x4x4xbf16>
    %12 = vector.shape_cast %11 : vector<1x4x4xbf16> to vector<4x4xbf16>
    %cst_16 = arith.constant dense<0.000000e+00> : vector<4x128xf32>
    %13 = tpu.matmul %12, %10, %cst_16 {dimension_numbers = #tpu.dot_dimension_numbers<[1], [0], [0], [1], [0, 0, 1, 1], [], []>} : vector<4x4xbf16>, vector<4x128xbf16>, vector<4x128xf32> -> vector<4x128xf32>
    %14 = arith.addf %3, %13 : vector<4x128xf32>
    %c1 = arith.constant 1 : index
    %c0_17 = arith.constant 0 : index
    %c0_18 = arith.constant 0 : index
    %15 = vector.load %arg2[%c1, %c0_17, %c0_18] : memref<3x128x128xbf16, #tpu.memory_space<vmem>>, vector<1x128x128xbf16>
    %16 = vector.shape_cast %15 : vector<1x128x128xbf16> to vector<128x128xbf16>
    %cst_19 = arith.constant dense<0.000000e+00> : vector<4x128xf32>
    %17 = tpu.matmul %6, %16, %cst_19 {dimension_numbers = #tpu.dot_dimension_numbers<[1], [0], [0], [1], [0, 0, 1, 1], [], []>} : vector<4x128xbf16>, vector<128x128xbf16>, vector<4x128xf32> -> vector<4x128xf32>
    %18 = arith.truncf %17 : vector<4x128xf32> to vector<4x128xbf16>
    %c1_20 = arith.constant 1 : index
    %c0_21 = arith.constant 0 : index
    %c0_22 = arith.constant 0 : index
    %19 = vector.load %arg3[%c1_20, %c0_21, %c0_22] : memref<3x4x4xbf16, #tpu.memory_space<vmem>>, vector<1x4x4xbf16>
    %20 = vector.shape_cast %19 : vector<1x4x4xbf16> to vector<4x4xbf16>
    %cst_23 = arith.constant dense<0.000000e+00> : vector<4x128xf32>
    %21 = tpu.matmul %20, %18, %cst_23 {dimension_numbers = #tpu.dot_dimension_numbers<[1], [0], [0], [1], [0, 0, 1, 1], [], []>} : vector<4x4xbf16>, vector<4x128xbf16>, vector<4x128xf32> -> vector<4x128xf32>
    %22 = arith.addf %14, %21 : vector<4x128xf32>
    %c2 = arith.constant 2 : index
    %c0_24 = arith.constant 0 : index
    %c0_25 = arith.constant 0 : index
    %23 = vector.load %arg2[%c2, %c0_24, %c0_25] : memref<3x128x128xbf16, #tpu.memory_space<vmem>>, vector<1x128x128xbf16>
    %24 = vector.shape_cast %23 : vector<1x128x128xbf16> to vector<128x128xbf16>
    %cst_26 = arith.constant dense<0.000000e+00> : vector<4x128xf32>
    %25 = tpu.matmul %6, %24, %cst_26 {dimension_numbers = #tpu.dot_dimension_numbers<[1], [0], [0], [1], [0, 0, 1, 1], [], []>} : vector<4x128xbf16>, vector<128x128xbf16>, vector<4x128xf32> -> vector<4x128xf32>
    %26 = arith.truncf %25 : vector<4x128xf32> to vector<4x128xbf16>
    %c2_27 = arith.constant 2 : index
    %c0_28 = arith.constant 0 : index
    %c0_29 = arith.constant 0 : index
    %27 = vector.load %arg3[%c2_27, %c0_28, %c0_29] : memref<3x4x4xbf16, #tpu.memory_space<vmem>>, vector<1x4x4xbf16>
    %28 = vector.shape_cast %27 : vector<1x4x4xbf16> to vector<4x4xbf16>
    %cst_30 = arith.constant dense<0.000000e+00> : vector<4x128xf32>
    %29 = tpu.matmul %28, %26, %cst_30 {dimension_numbers = #tpu.dot_dimension_numbers<[1], [0], [0], [1], [0, 0, 1, 1], [], []>} : vector<4x4xbf16>, vector<4x128xbf16>, vector<4x128xf32> -> vector<4x128xf32>
    %30 = arith.addf %22, %29 : vector<4x128xf32>
    %cst_31 = arith.constant 0.000000e+00 : f32
    %31 = vector.broadcast %cst_31 : f32 to vector<4x128xf32>
    %32 = arith.maximumf %30, %31 : vector<4x128xf32>
    %33 = arith.truncf %32 : vector<4x128xf32> to vector<4x128xbf16>
    %c0_32 = arith.constant 0 : index
    %c128 = arith.constant 128 : index
    %34 = vector.load %arg8[%c0_32, %c128] : memref<4x384xbf16, #tpu.memory_space<vmem>>, vector<4x128xbf16>
    tpu.vector_store %arg8[%c0_32, %c128], %33 {strides = array<i32>} : memref<4x384xbf16, #tpu.memory_space<vmem>>, vector<4x128xbf16>,
    %35 = arith.extf %6 : vector<4x128xbf16> to vector<4x128xf32>
    %36 = vector.broadcast %4 : vector<4x1xf32> to vector<4x128xf32>
    %37 = arith.addf %36, %35 : vector<4x128xf32>
    %c0_33 = arith.constant 0 : index
    %c64 = arith.constant 64 : index
    %38 = vector.load %arg8[%c0_33, %c64] : memref<4x384xbf16, #tpu.memory_space<vmem>>, vector<4x128xbf16>
    %c0_34 = arith.constant 0 : index
    %c0_35 = arith.constant 0 : index
    %c0_36 = arith.constant 0 : index
    %39 = vector.load %arg5[%c0_34, %c0_35, %c0_36] : memref<9x4x4xbf16, #tpu.memory_space<vmem>>, vector<1x4x4xbf16>
    %40 = vector.shape_cast %39 : vector<1x4x4xbf16> to vector<4x4xbf16>
    %cst_37 = arith.constant dense<0.000000e+00> : vector<4x128xf32>
    %41 = tpu.matmul %40, %38, %cst_37 {dimension_numbers = #tpu.dot_dimension_numbers<[1], [0], [0], [1], [0, 0, 1, 1], [], []>} : vector<4x4xbf16>, vector<4x128xbf16>, vector<4x128xf32> -> vector<4x128xf32>
    %42 = arith.addf %37, %41 : vector<4x128xf32>
    %c0_38 = arith.constant 0 : index
    %c80 = arith.constant 80 : index
    %43 = vector.load %arg8[%c0_38, %c80] : memref<4x384xbf16, #tpu.memory_space<vmem>>, vector<4x128xbf16>
    %c1_39 = arith.constant 1 : index
    %c0_40 = arith.constant 0 : index
    %c0_41 = arith.constant 0 : index
    %44 = vector.load %arg5[%c1_39, %c0_40, %c0_41] : memref<9x4x4xbf16, #tpu.memory_space<vmem>>, vector<1x4x4xbf16>
    %45 = vector.shape_cast %44 : vector<1x4x4xbf16> to vector<4x4xbf16>
    %cst_42 = arith.constant dense<0.000000e+00> : vector<4x128xf32>
    %46 = tpu.matmul %45, %43, %cst_42 {dimension_numbers = #tpu.dot_dimension_numbers<[1], [0], [0], [1], [0, 0, 1, 1], [], []>} : vector<4x4xbf16>, vector<4x128xbf16>, vector<4x128xf32> -> vector<4x128xf32>
    %47 = arith.addf %42, %46 : vector<4x128xf32>
    %c0_43 = arith.constant 0 : index
    %c96 = arith.constant 96 : index
    %48 = vector.load %arg8[%c0_43, %c96] : memref<4x384xbf16, #tpu.memory_space<vmem>>, vector<4x128xbf16>
    %c2_44 = arith.constant 2 : index
    %c0_45 = arith.constant 0 : index
    %c0_46 = arith.constant 0 : index
    %49 = vector.load %arg5[%c2_44, %c0_45, %c0_46] : memref<9x4x4xbf16, #tpu.memory_space<vmem>>, vector<1x4x4xbf16>
    %50 = vector.shape_cast %49 : vector<1x4x4xbf16> to vector<4x4xbf16>
    %cst_47 = arith.constant dense<0.000000e+00> : vector<4x128xf32>
    %51 = tpu.matmul %50, %48, %cst_47 {dimension_numbers = #tpu.dot_dimension_numbers<[1], [0], [0], [1], [0, 0, 1, 1], [], []>} : vector<4x4xbf16>, vector<4x128xbf16>, vector<4x128xf32> -> vector<4x128xf32>
    %52 = arith.addf %47, %51 : vector<4x128xf32>
    %c0_48 = arith.constant 0 : index
    %c112 = arith.constant 112 : index
    %53 = vector.load %arg8[%c0_48, %c112] : memref<4x384xbf16, #tpu.memory_space<vmem>>, vector<4x128xbf16>
    %c3 = arith.constant 3 : index
    %c0_49 = arith.constant 0 : index
    %c0_50 = arith.constant 0 : index
    %54 = vector.load %arg5[%c3, %c0_49, %c0_50] : memref<9x4x4xbf16, #tpu.memory_space<vmem>>, vector<1x4x4xbf16>
    %55 = vector.shape_cast %54 : vector<1x4x4xbf16> to vector<4x4xbf16>
    %cst_51 = arith.constant dense<0.000000e+00> : vector<4x128xf32>
    %56 = tpu.matmul %55, %53, %cst_51 {dimension_numbers = #tpu.dot_dimension_numbers<[1], [0], [0], [1], [0, 0, 1, 1], [], []>} : vector<4x4xbf16>, vector<4x128xbf16>, vector<4x128xf32> -> vector<4x128xf32>
    %57 = arith.addf %52, %56 : vector<4x128xf32>
    %c0_52 = arith.constant 0 : index
    %c128_53 = arith.constant 128 : index
    %58 = vector.load %arg8[%c0_52, %c128_53] : memref<4x384xbf16, #tpu.memory_space<vmem>>, vector<4x128xbf16>
    %c4 = arith.constant 4 : index
    %c0_54 = arith.constant 0 : index
    %c0_55 = arith.constant 0 : index
    %59 = vector.load %arg5[%c4, %c0_54, %c0_55] : memref<9x4x4xbf16, #tpu.memory_space<vmem>>, vector<1x4x4xbf16>
    %60 = vector.shape_cast %59 : vector<1x4x4xbf16> to vector<4x4xbf16>
    %cst_56 = arith.constant dense<0.000000e+00> : vector<4x128xf32>
    %61 = tpu.matmul %60, %58, %cst_56 {dimension_numbers = #tpu.dot_dimension_numbers<[1], [0], [0], [1], [0, 0, 1, 1], [], []>} : vector<4x4xbf16>, vector<4x128xbf16>, vector<4x128xf32> -> vector<4x128xf32>
    %62 = arith.addf %57, %61 : vector<4x128xf32>
    %c0_57 = arith.constant 0 : index
    %c144 = arith.constant 144 : index
    %63 = vector.load %arg8[%c0_57, %c144] : memref<4x384xbf16, #tpu.memory_space<vmem>>, vector<4x128xbf16>
    %c5 = arith.constant 5 : index
    %c0_58 = arith.constant 0 : index
    %c0_59 = arith.constant 0 : index
    %64 = vector.load %arg5[%c5, %c0_58, %c0_59] : memref<9x4x4xbf16, #tpu.memory_space<vmem>>, vector<1x4x4xbf16>
    %65 = vector.shape_cast %64 : vector<1x4x4xbf16> to vector<4x4xbf16>
    %cst_60 = arith.constant dense<0.000000e+00> : vector<4x128xf32>
    %66 = tpu.matmul %65, %63, %cst_60 {dimension_numbers = #tpu.dot_dimension_numbers<[1], [0], [0], [1], [0, 0, 1, 1], [], []>} : vector<4x4xbf16>, vector<4x128xbf16>, vector<4x128xf32> -> vector<4x128xf32>
    %67 = arith.addf %62, %66 : vector<4x128xf32>
    %c0_61 = arith.constant 0 : index
    %c160 = arith.constant 160 : index
    %68 = vector.load %arg8[%c0_61, %c160] : memref<4x384xbf16, #tpu.memory_space<vmem>>, vector<4x128xbf16>
    %c6 = arith.constant 6 : index
    %c0_62 = arith.constant 0 : index
    %c0_63 = arith.constant 0 : index
    %69 = vector.load %arg5[%c6, %c0_62, %c0_63] : memref<9x4x4xbf16, #tpu.memory_space<vmem>>, vector<1x4x4xbf16>
    %70 = vector.shape_cast %69 : vector<1x4x4xbf16> to vector<4x4xbf16>
    %cst_64 = arith.constant dense<0.000000e+00> : vector<4x128xf32>
    %71 = tpu.matmul %70, %68, %cst_64 {dimension_numbers = #tpu.dot_dimension_numbers<[1], [0], [0], [1], [0, 0, 1, 1], [], []>} : vector<4x4xbf16>, vector<4x128xbf16>, vector<4x128xf32> -> vector<4x128xf32>
    %72 = arith.addf %67, %71 : vector<4x128xf32>
    %c0_65 = arith.constant 0 : index
    %c176 = arith.constant 176 : index
    %73 = vector.load %arg8[%c0_65, %c176] : memref<4x384xbf16, #tpu.memory_space<vmem>>, vector<4x128xbf16>
    %c7 = arith.constant 7 : index
    %c0_66 = arith.constant 0 : index
    %c0_67 = arith.constant 0 : index
    %74 = vector.load %arg5[%c7, %c0_66, %c0_67] : memref<9x4x4xbf16, #tpu.memory_space<vmem>>, vector<1x4x4xbf16>
    %75 = vector.shape_cast %74 : vector<1x4x4xbf16> to vector<4x4xbf16>
    %cst_68 = arith.constant dense<0.000000e+00> : vector<4x128xf32>
    %76 = tpu.matmul %75, %73, %cst_68 {dimension_numbers = #tpu.dot_dimension_numbers<[1], [0], [0], [1], [0, 0, 1, 1], [], []>} : vector<4x4xbf16>, vector<4x128xbf16>, vector<4x128xf32> -> vector<4x128xf32>
    %77 = arith.addf %72, %76 : vector<4x128xf32>
    %c0_69 = arith.constant 0 : index
    %c192 = arith.constant 192 : index
    %78 = vector.load %arg8[%c0_69, %c192] : memref<4x384xbf16, #tpu.memory_space<vmem>>, vector<4x128xbf16>
    %c8 = arith.constant 8 : index
    %c0_70 = arith.constant 0 : index
    %c0_71 = arith.constant 0 : index
    %79 = vector.load %arg5[%c8, %c0_70, %c0_71] : memref<9x4x4xbf16, #tpu.memory_space<vmem>>, vector<1x4x4xbf16>
    %80 = vector.shape_cast %79 : vector<1x4x4xbf16> to vector<4x4xbf16>
    %cst_72 = arith.constant dense<0.000000e+00> : vector<4x128xf32>
    %81 = tpu.matmul %80, %78, %cst_72 {dimension_numbers = #tpu.dot_dimension_numbers<[1], [0], [0], [1], [0, 0, 1, 1], [], []>} : vector<4x4xbf16>, vector<4x128xbf16>, vector<4x128xf32> -> vector<4x128xf32>
    %82 = arith.addf %77, %81 : vector<4x128xf32>
    %cst_73 = arith.constant 0.000000e+00 : f32
    %83 = vector.broadcast %cst_73 : f32 to vector<4x128xf32>
    %84 = arith.maximumf %82, %83 : vector<4x128xf32>
    %85 = arith.truncf %84 : vector<4x128xf32> to vector<4x128xbf16>
    %c0_74 = arith.constant 0 : index
    %c0_75 = arith.constant 0 : index
    %c0_76 = arith.constant 0 : index
    %86 = vector.load %arg7[%c0_74, %c0_75, %c0_76] : memref<1x4x128xbf16, #tpu.memory_space<vmem>>, vector<1x4x128xbf16>
    %87 = vector.shape_cast %86 : vector<1x4x128xbf16> to vector<4x128xbf16>
    %88 = vector.shape_cast %85 : vector<4x128xbf16> to vector<1x4x128xbf16>
    tpu.vector_store %arg7[%c0_74, %c0_75, %c0_76], %88 {strides = array<i32>} : memref<1x4x128xbf16, #tpu.memory_space<vmem>>, vector<1x4x128xbf16>,
    return
  }
  func.func @transform_0(%arg0: i32) -> (i32, i32, i32) {
    %c0_i32 = arith.constant 0 : i32
    %c0_i32_0 = arith.constant 0 : i32
    %c0_i32_1 = arith.constant 0 : i32
    return %arg0, %c0_i32, %c0_i32_0 : i32, i32, i32
  }
  func.func @transform_1(%arg0: i32) -> (i32, i32, i32) {
    %c0_i32 = arith.constant 0 : i32
    %c0_i32_0 = arith.constant 0 : i32
    %c0_i32_1 = arith.constant 0 : i32
    %c0_i32_2 = arith.constant 0 : i32
    return %c0_i32, %c0_i32_0, %c0_i32_1 : i32, i32, i32
  }
  func.func @transform_2(%arg0: i32) -> (i32, i32, i32) {
    %c0_i32 = arith.constant 0 : i32
    %c0_i32_0 = arith.constant 0 : i32
    %c0_i32_1 = arith.constant 0 : i32
    %c0_i32_2 = arith.constant 0 : i32
    return %c0_i32, %c0_i32_0, %c0_i32_1 : i32, i32, i32
  }
  func.func @transform_3(%arg0: i32) -> (i32, i32) {
    %c0_i32 = arith.constant 0 : i32
    %c0_i32_0 = arith.constant 0 : i32
    %c0_i32_1 = arith.constant 0 : i32
    return %c0_i32, %c0_i32_0 : i32, i32
  }
  func.func @transform_4(%arg0: i32) -> (i32, i32, i32) {
    %c0_i32 = arith.constant 0 : i32
    %c0_i32_0 = arith.constant 0 : i32
    %c0_i32_1 = arith.constant 0 : i32
    %c0_i32_2 = arith.constant 0 : i32
    return %c0_i32, %c0_i32_0, %c0_i32_1 : i32, i32, i32
  }
  func.func @transform_5(%arg0: i32) -> (i32, i32) {
    %c0_i32 = arith.constant 0 : i32
    %c0_i32_0 = arith.constant 0 : i32
    %c0_i32_1 = arith.constant 0 : i32
    return %c0_i32, %c0_i32_0 : i32, i32
  }
  func.func @transform_6(%arg0: i32) -> (i32, i32, i32) {
    %c0_i32 = arith.constant 0 : i32
    %c0_i32_0 = arith.constant 0 : i32
    %c0_i32_1 = arith.constant 0 : i32
    return %arg0, %c0_i32, %c0_i32_0 : i32, i32, i32
  }
}

</mosaic_0001>

<llo_original>
// kernel: tpu_custom_call.1
$region0: #{tpu_custom_call.1}
  #allocation0 [shape = 'u32[]', space=smem, size = 0x4, offset = 0x4, fixed_abs, tag = 'smem constant byte address 0x4 - core index']
  #allocation1 [shape = 'u32[72,128]{1,0:T(1,128)}', space=vmem, size = 0x9000, scoped, tag = 'internal scratch']
  #allocation2 [shape = 'bf16[4,384]{1,0:T(4,128)(2,1)}', space=vmem, size = 0xc00, scoped, tag = 'scratch operand']
  %s0 = inlined_call_operand.vmem [shape: bf16[2,4,128], index: 0, kind: input, shape index: {}]
  %s1 = inlined_call_operand.hbm [shape: bf16[3,128,128], index: 1, kind: input, shape index: {}]
  %s2 = inlined_call_operand.vmem [shape: bf16[3,4,4], index: 2, kind: input, shape index: {}]
  %s3 = inlined_call_operand.vmem [shape: f32[4,128], index: 3, kind: input, shape index: {}]
  %s4 = inlined_call_operand.vmem [shape: bf16[9,4,4], index: 4, kind: input, shape index: {}]
  %s5 = inlined_call_operand.vmem [shape: f32[4,1], index: 5, kind: input, shape index: {}]
  %s6 = inlined_call_operand.hbm [shape: bf16[2,4,128], index: 6, kind: output, shape index: {}]
  %s7 = sld [smem:[#allocation0]]
  $region61: #{tpu_custom_call.1} parent=0
    _
  %s9 = ssub.s32 1, %s7
  %s10 = scalar_select 0, %s9, %s7
  $region1: #{tpu_custom_call.1} parent=0
    #allocation3 [shape = 'u8[98304]{0}', space=vmem, size = 0x18000, scoped, tag = 'input window, operand 1, single buffered']
    #allocation4 [shape = 's32[2]{0}', space=sflag, size = 0x8, scoped, tag = 'scoped memory for tpu_custom_call.1']
    #allocation5 [shape = 's32[2]{0}', space=sflag, size = 0x8, scoped, tag = 'scoped memory for tpu_custom_call.1']
    #allocation6 [shape = 'u8[2048]{0}', space=vmem, size = 0x800, scoped, tag = 'output window, operand 0']
    %11 = vsyncpa [#allocation4], 0
    %12 = vsyncpa [#allocation5], 0
    %s13 = scalar_lea.sflag [#allocation5], 1
    %14 = vsyncpa %s13, 0
    loop: start=0, step=1, limit=4
    $region2: #{tpu_custom_call.1} parent=1 // loop_pre_header
      _
    $region3: #{tpu_custom_call.1} parent=1 // loop_header
      %s16 = sphi 0, %s20
      %p17 = scmp.ge.s32.totalorder %s16, 4
      %s26 = sphi 0, %s28
      %s29 = sphi 0, %s26
      %s30 = sphi 0, %s29
      %s46 = sphi 0, %s30
      %s50 = sphi 0, %s50
      %s52 = sphi 0, %s50
      %s53 = sphi 0, %s52
      %s67 = sphi 0, %s53
      %s71 = sphi 0, %s71
      %s73 = sphi 0, %s71
      %s74 = sphi 0, %s73
      %s88 = sphi 0, %s74
      %s92 = sphi 0, %s92
      %s94 = sphi 0, %s92
      %s95 = sphi 0, %s94
      %s109 = sphi 0, %s95
      %s113 = sphi 0, %s113
      %s115 = sphi 0, %s113
      %s116 = sphi 0, %s115
      %s130 = sphi 0, %s116
      %s134 = sphi 0, %s134
      %s136 = sphi 0, %s134
      %s137 = sphi 0, %s136
      %s151 = sphi 0, %s137
      %s157 = sphi 0, %s159
      %s160 = sphi 0, %s157
      %s161 = sphi 0, %s160
      %s177 = sphi 0, %s161
    $region4: #{tpu_custom_call.1} parent=1 // loop_header_branch
      %19 = sbr.rel (%p17) target = $region8
    $region5: #{tpu_custom_call.1} parent=1 // loop_body
      %s21 = ssub.s32 %s16, 1
      %s22 = ssub.s32 %s16, 2
      %s23 = sadd.s32 %s16, 1
      %s24 = ssub.s32 %s16, %s23
      %p25 = scmp.eq.s32.totalorder %s24, 0
      %s27 = sadd.s32 %s26, 1
      %s28 = scalar_select %p25, %s26, %s27
      %p31 = pneg %p25
      %p32 = scmp.eq.s32.totalorder %s16, 1
      %p33 = por %p31, %p32
      %p34 = scmp.ne.s32.totalorder %s26, %s29
      %p35 = scmp.eq.s32.totalorder %s16, 0
      %p36 = por %p34, %p35
      %p37 = scmp.ne.s32.totalorder %s26, %s29
      %p38 = scmp.eq.s32.totalorder %s21, 1
      %p39 = por %p37, %p38
      %p40 = scmp.ne.s32.totalorder %s29, %s30
      %p41 = scmp.eq.s32.totalorder %s21, 0
      %p42 = por %p40, %p41
      %p43 = scmp.ne.s32.totalorder %s29, %s30
      %p44 = scmp.eq.s32.totalorder %s22, 1
      %p45 = por %p43, %p44
      %p47 = scmp.ne.s32.totalorder %s30, %s46
      %p48 = scmp.eq.s32.totalorder %s22, 0
      %p49 = por %p47, %p48
      %s51 = sadd.s32 %s50, 1
      %p54 = scmp.eq.s32.totalorder %s16, 1
      %p55 = scmp.ne.s32.totalorder %s50, %s52
      %p56 = scmp.eq.s32.totalorder %s16, 0
      %p57 = por %p55, %p56
      %p58 = scmp.ne.s32.totalorder %s50, %s52
      %p59 = scmp.eq.s32.totalorder %s21, 1
      %p60 = por %p58, %p59
      %p61 = scmp.ne.s32.totalorder %s52, %s53
      %p62 = scmp.eq.s32.totalorder %s21, 0
      %p63 = por %p61, %p62
      %p64 = scmp.ne.s32.totalorder %s52, %s53
      %p65 = scmp.eq.s32.totalorder %s22, 1
      %p66 = por %p64, %p65
      %p68 = scmp.ne.s32.totalorder %s53, %s67
      %p69 = scmp.eq.s32.totalorder %s22, 0
      %p70 = por %p68, %p69
      %s72 = sadd.s32 %s71, 1
      %p75 = scmp.eq.s32.totalorder %s16, 1
      %p76 = scmp.ne.s32.totalorder %s71, %s73
      %p77 = scmp.eq.s32.totalorder %s16, 0
      %p78 = por %p76, %p77
      %p79 = scmp.ne.s32.totalorder %s71, %s73
      %p80 = scmp.eq.s32.totalorder %s21, 1
      %p81 = por %p79, %p80
      %p82 = scmp.ne.s32.totalorder %s73, %s74
      %p83 = scmp.eq.s32.totalorder %s21, 0
      %p84 = por %p82, %p83
      %p85 = scmp.ne.s32.totalorder %s73, %s74
      %p86 = scmp.eq.s32.totalorder %s22, 1
      %p87 = por %p85, %p86
      %p89 = scmp.ne.s32.totalorder %s74, %s88
      %p90 = scmp.eq.s32.totalorder %s22, 0
      %p91 = por %p89, %p90
      %s93 = sadd.s32 %s92, 1
      %p96 = scmp.eq.s32.totalorder %s16, 1
      %p97 = scmp.ne.s32.totalorder %s92, %s94
      %p98 = scmp.eq.s32.totalorder %s16, 0
      %p99 = por %p97, %p98
      %p100 = scmp.ne.s32.totalorder %s92, %s94
      %p101 = scmp.eq.s32.totalorder %s21, 1
      %p102 = por %p100, %p101
      %p103 = scmp.ne.s32.totalorder %s94, %s95
      %p104 = scmp.eq.s32.totalorder %s21, 0
      %p105 = por %p103, %p104
      %p106 = scmp.ne.s32.totalorder %s94, %s95
      %p107 = scmp.eq.s32.totalorder %s22, 1
      %p108 = por %p106, %p107
      %p110 = scmp.ne.s32.totalorder %s95, %s109
      %p111 = scmp.eq.s32.totalorder %s22, 0
      %p112 = por %p110, %p111
      %s114 = sadd.s32 %s113, 1
      %p117 = scmp.eq.s32.totalorder %s16, 1
      %p118 = scmp.ne.s32.totalorder %s113, %s115
      %p119 = scmp.eq.s32.totalorder %s16, 0
      %p120 = por %p118, %p119
      %p121 = scmp.ne.s32.totalorder %s113, %s115
      %p122 = scmp.eq.s32.totalorder %s21, 1
      %p123 = por %p121, %p122
      %p124 = scmp.ne.s32.totalorder %s115, %s116
      %p125 = scmp.eq.s32.totalorder %s21, 0
      %p126 = por %p124, %p125
      %p127 = scmp.ne.s32.totalorder %s115, %s116
      %p128 = scmp.eq.s32.totalorder %s22, 1
      %p129 = por %p127, %p128
      %p131 = scmp.ne.s32.totalorder %s116, %s130
      %p132 = scmp.eq.s32.totalorder %s22, 0
      %p133 = por %p131, %p132
      %s135 = sadd.s32 %s134, 1
      %p138 = scmp.eq.s32.totalorder %s16, 1
      %p139 = scmp.ne.s32.totalorder %s134, %s136
      %p140 = scmp.eq.s32.totalorder %s16, 0
      %p141 = por %p139, %p140
      %p142 = scmp.ne.s32.totalorder %s134, %s136
      %p143 = scmp.eq.s32.totalorder %s21, 1
      %p144 = por %p142, %p143
      %p145 = scmp.ne.s32.totalorder %s136, %s137
      %p146 = scmp.eq.s32.totalorder %s21, 0
      %p147 = por %p145, %p146
      %p148 = scmp.ne.s32.totalorder %s136, %s137
      %p149 = scmp.eq.s32.totalorder %s22, 1
      %p150 = por %p148, %p149
      %p152 = scmp.ne.s32.totalorder %s137, %s151
      %p153 = scmp.eq.s32.totalorder %s22, 0
      %p154 = por %p152, %p153
      %s155 = ssub.s32 %s16, %s23
      %p156 = scmp.eq.s32.totalorder %s155, 0
      %s158 = sadd.s32 %s157, 1
      %s159 = scalar_select %p156, %s157, %s158
      %p162 = pneg %p156
      %p163 = scmp.eq.s32.totalorder %s16, 1
      %p164 = por %p162, %p163
      %p165 = scmp.ne.s32.totalorder %s157, %s160
      %p166 = scmp.eq.s32.totalorder %s16, 0
      %p167 = por %p165, %p166
      %p168 = scmp.ne.s32.totalorder %s157, %s160
      %p169 = scmp.eq.s32.totalorder %s21, 1
      %p170 = por %p168, %p169
      %p171 = scmp.ne.s32.totalorder %s160, %s161
      %p172 = scmp.eq.s32.totalorder %s21, 0
      %p173 = por %p171, %p172
      %p174 = scmp.ne.s32.totalorder %s160, %s161
      %p175 = scmp.eq.s32.totalorder %s22, 1
      %p176 = por %p174, %p175
      %p178 = scmp.ne.s32.totalorder %s161, %s177
      %p179 = scmp.eq.s32.totalorder %s22, 0
      %p180 = por %p178, %p179
      %p181 = scmp.le.s32.totalorder 1, %s16
      %p182 = scmp.lt.s32.totalorder %s16, 3
      %p183 = pnand %p181, %p182
      %p184 = pneg %p183
      // Predicated region
      $region9: #{tpu_custom_call.1} parent=5 // pred_check
        _
      $region10: #{tpu_custom_call.1} parent=5 // pred_check_branch
        %186 = sbr.rel (%p183) target = $region12
      $region11: #{tpu_custom_call.1} parent=5 // pred_region
        %s187 = ssub.s32 %s16, 1
        // Predicated region
        $region13: #{tpu_custom_call.1} parent=11 // pred_check
          %p188 = pneg %p63
        $region14: #{tpu_custom_call.1} parent=11 // pred_check_branch
          %190 = sbr.rel (%p188) target = $region16
        $region15: #{tpu_custom_call.1} parent=11 // pred_region
          %192 = vsyncadd [#allocation4], 0
          %s193 = sshll.u32 %s1, 4
          %s194 = int_to_ptr.hbm [resolvable:$true] %s193
          %s195 = sshll.u32 [#allocation3], 4
          %s196 = int_to_ptr.vmem [resolvable:$true] %s195
          %201 = dma.hbm_to_vmem [thread:$0]  %s194, 3072, %s196, [#allocation4], 64, 64, 4
        $region16: #{tpu_custom_call.1} parent=11 // pred_fallthru
          _
        // Predicated region
        $region17: #{tpu_custom_call.1} parent=11 // pred_check
          %p202 = pneg %p84
        $region18: #{tpu_custom_call.1} parent=11 // pred_check_branch
          %204 = sbr.rel (%p202) target = $region20
        $region19: #{tpu_custom_call.1} parent=11 // pred_region
          _
        $region20: #{tpu_custom_call.1} parent=11 // pred_fallthru
          _
        // Predicated region
        $region21: #{tpu_custom_call.1} parent=11 // pred_check
          %p205 = pneg %p105
        $region22: #{tpu_custom_call.1} parent=11 // pred_check_branch
          %207 = sbr.rel (%p205) target = $region24
        $region23: #{tpu_custom_call.1} parent=11 // pred_region
          _
        $region24: #{tpu_custom_call.1} parent=11 // pred_fallthru
          _
        // Predicated region
        $region25: #{tpu_custom_call.1} parent=11 // pred_check
          %p208 = pneg %p126
        $region26: #{tpu_custom_call.1} parent=11 // pred_check_branch
          %210 = sbr.rel (%p208) target = $region28
        $region27: #{tpu_custom_call.1} parent=11 // pred_region
          _
        $region28: #{tpu_custom_call.1} parent=11 // pred_fallthru
          _
        // Predicated region
        $region29: #{tpu_custom_call.1} parent=11 // pred_check
          %p211 = pneg %p147
        $region30: #{tpu_custom_call.1} parent=11 // pred_check_branch
          %213 = sbr.rel (%p211) target = $region32
        $region31: #{tpu_custom_call.1} parent=11 // pred_region
          _
        $region32: #{tpu_custom_call.1} parent=11 // pred_fallthru
          _
      $region12: #{tpu_custom_call.1} parent=5 // pred_fallthru
        _
      %p214 = scmp.lt.s32.totalorder %s16, 2
      // Predicated region
      $region33: #{tpu_custom_call.1} parent=5 // pred_check
        %p215 = pneg %p214
      $region34: #{tpu_custom_call.1} parent=5 // pred_check_branch
        %217 = sbr.rel (%p215) target = $region36
      $region35: #{tpu_custom_call.1} parent=5 // pred_region
        // Predicated region
        $region37: #{tpu_custom_call.1} parent=35 // pred_check
          %p218 = pneg %p36
        $region38: #{tpu_custom_call.1} parent=35 // pred_check_branch
          %220 = sbr.rel (%p218) target = $region40
        $region39: #{tpu_custom_call.1} parent=35 // pred_region
          %p221 = scmp.lt.s32.totalorder %s16, 1
          %s222 = scalar_select %p221, %s16, 1
          %s223 = smul.addr %s222, 2
          %s224 = scalar_lea.vmem %s0, %s223
        $region40: #{tpu_custom_call.1} parent=35 // pred_fallthru
          _
      $region36: #{tpu_custom_call.1} parent=5 // pred_fallthru
        _
      %p225 = scmp.le.s32.totalorder 1, %s16
      %p226 = scmp.lt.s32.totalorder %s16, 3
      %p227 = pnand %p225, %p226
      %p228 = pneg %p227
      // Predicated region
      $region41: #{tpu_custom_call.1} parent=5 // pred_check
        _
      $region42: #{tpu_custom_call.1} parent=5 // pred_check_branch
        %230 = sbr.rel (%p227) target = $region44
      $region43: #{tpu_custom_call.1} parent=5 // pred_region
        %s231 = ssub.s32 %s16, 1
        // Predicated region
        $region45: #{tpu_custom_call.1} parent=43 // pred_check
          %p232 = pneg %p63
        $region46: #{tpu_custom_call.1} parent=43 // pred_check_branch
          %234 = sbr.rel (%p232) target = $region48
        $region47: #{tpu_custom_call.1} parent=43 // pred_region
          %236 = dma.done [#allocation4], 3072
        $region48: #{tpu_custom_call.1} parent=43 // pred_fallthru
          _
        %p237 = scmp.lt.s32.totalorder %s21, 1
        %s238 = scalar_select %p237, %s21, 1
        %s239 = smul.addr %s238, 2
        %s240 = scalar_lea.vmem %s0, %s239
        %p241 = pneg %p42
        %p242 = pneg %p39
        %p243 = pneg %p63
        %p244 = pneg %p60
        %p245 = pneg %p84
        %p246 = pneg %p81
        %p247 = pneg %p105
        %p248 = pneg %p102
        %p249 = pneg %p126
        %p250 = pneg %p123
        %p251 = pneg %p147
        %p252 = pneg %p144
        %p253 = pneg %p173
        %p254 = pneg %p170
        %s255 = sand.u32 %s160, 1
        %s256 = scalar_lea.sflag [#allocation5], %s255
        %s257 = sand.u32 %s160, 1
        %s258 = smul.addr %s257, 2
        %s259 = scalar_lea.vmem [#allocation6], %s258
        %p260 = scmp.lt.s32.totalorder %s21, 1
        %s261 = scalar_select %p260, %s21, 1
        %s262 = smul.addr %s261, 2
        %s263 = scalar_lea.vmem %s0, %s262
        %265 = vst [vmem:[#allocation2] sm:$0x3] 0
        %266 = vst [vmem:[#allocation2 + $0x4] sm:$0x3] 0
        %v267 = vld [vmem:[%s3] sm:$0xf]
        %v268 = vld [vmem:[%s5] sm:$0xf]
        %v269 = vld [vmem:[%s263] sm:$0x3]
        %v270 = vld [vmem:[#allocation3] sm:$0xf]
        %v271 = vld [vmem:[#allocation3 + $0x4] sm:$0xf]
        %v272 = vld [vmem:[#allocation3 + $0x8] sm:$0xf]
        %v273 = vld [vmem:[#allocation3 + $0xc] sm:$0xf]
        %v274 = vld [vmem:[#allocation3 + $0x10] sm:$0xf]
        %v275 = vld [vmem:[#allocation3 + $0x14] sm:$0xf]
        %v276 = vld [vmem:[#allocation3 + $0x18] sm:$0xf]
        %v277 = vld [vmem:[#allocation3 + $0x1c] sm:$0xf]
        %v278 = vld [vmem:[#allocation3 + $0x20] sm:$0xf]
        %v279 = vld [vmem:[#allocation3 + $0x24] sm:$0xf]
        %v280 = vld [vmem:[#allocation3 + $0x28] sm:$0xf]
        %v281 = vld [vmem:[#allocation3 + $0x2c] sm:$0xf]
        %v282 = vld [vmem:[#allocation3 + $0x30] sm:$0xf]
        %v283 = vld [vmem:[#allocation3 + $0x34] sm:$0xf]
        %v284 = vld [vmem:[#allocation3 + $0x38] sm:$0xf]
        %v285 = vld [vmem:[#allocation3 + $0x3c] sm:$0xf]
        %v302 = vunpack.c.l.b16 %v270
        %v303 = vunpack.c.l.b16 %v271
        %v304 = vunpack.c.l.b16 %v272
        %v305 = vunpack.c.l.b16 %v273
        %v306 = vunpack.c.l.b16 %v274
        %v307 = vunpack.c.l.b16 %v275
        %v308 = vunpack.c.l.b16 %v276
        %v309 = vunpack.c.l.b16 %v277
        %v310 = vunpack.c.l.b16 %v278
        %v311 = vunpack.c.l.b16 %v279
        %v312 = vunpack.c.l.b16 %v280
        %v313 = vunpack.c.l.b16 %v281
        %v314 = vunpack.c.l.b16 %v282
        %v315 = vunpack.c.l.b16 %v283
        %v316 = vunpack.c.l.b16 %v284
        %v317 = vunpack.c.l.b16 %v285
        %v318 = vpack.c.b16 %v303, %v302
        %v319 = vpack.c.b16 %v305, %v304
        %v320 = vpack.c.b16 %v307, %v306
        %v321 = vpack.c.b16 %v309, %v308
        %v322 = vpack.c.b16 %v311, %v310
        %v323 = vpack.c.b16 %v313, %v312
        %v324 = vpack.c.b16 %v315, %v314
        %v325 = vpack.c.b16 %v317, %v316
        %334 = vmatpush.bf16.msra.mxu0 %v325
        %335 = vmatpush.bf16.msra.mxu0 %v324
        %336 = vmatpush.bf16.msra.mxu0 %v323
        %337 = vmatpush.bf16.msra.mxu0 %v322
        %338 = vmatpush.bf16.msra.mxu0 %v321
        %339 = vmatpush.bf16.msra.mxu0 %v320
        %340 = vmatpush.bf16.msra.mxu0 %v319
        %341 = vmatpush.bf16.msra.mxu0 %v318
        %342 = vmatmul.bf16.gmra.mxu0 %v269
        %v343 = vpop.f32.mrf.mxu0
        %v344 = vadd.f32 0.0, %v343
        %v345 = vpop.f32.mrf.mxu0
        %346 = vdwg.mxu0
        %v347 = vpack.c.bf16 %v344, %v344
        %v348 = vld [vmem:[%s2] sm:$0x3]
        %vm349 = vcmask 31744
        %v351 = vsel %vm349, %v348, 0
        %vm353 = vcmask 1041408
        %v355 = vsel %vm353, %v347, 0
        %357 = vmatpush.bf16.msra.mxu0 0
        %358 = vmatpush.bf16.msra.mxu0 0
        %359 = vmatpush.bf16.msra.mxu0 0
        %360 = vmatpush.bf16.msra.mxu0 0
        %361 = vmatpush.bf16.msra.mxu0 0
        %362 = vmatpush.bf16.msra.mxu0 0
        %363 = vmatpush.bf16.msra.mxu0 0
        %364 = vmatpush.bf16.msra.mxu0 %v355
        %365 = vmatmul.bf16.gmra.mxu0 %v351
        %v366 = vpop.f32.mrf.mxu0
        %v367 = vadd.f32 0.0, %v366
        %v368 = vpop.f32.mrf.mxu0
        %369 = vdwg.mxu0
        %v370 = vadd.f32 %v267, %v367
        %s371 = scalar_lea.vmem [#allocation3], 64
        %v372 = vld [vmem:[%s371] sm:$0xf]
        %v373 = vld [vmem:[%s371 + $0x4] sm:$0xf]
        %v374 = vld [vmem:[%s371 + $0x8] sm:$0xf]
        %v375 = vld [vmem:[%s371 + $0xc] sm:$0xf]
        %v376 = vld [vmem:[%s371 + $0x10] sm:$0xf]
        %v377 = vld [vmem:[%s371 + $0x14] sm:$0xf]
        %v378 = vld [vmem:[%s371 + $0x18] sm:$0xf]
        %v379 = vld [vmem:[%s371 + $0x1c] sm:$0xf]
        %v380 = vld [vmem:[%s371 + $0x20] sm:$0xf]
        %v381 = vld [vmem:[%s371 + $0x24] sm:$0xf]
        %v382 = vld [vmem:[%s371 + $0x28] sm:$0xf]
        %v383 = vld [vmem:[%s371 + $0x2c] sm:$0xf]
        %v384 = vld [vmem:[%s371 + $0x30] sm:$0xf]
        %v385 = vld [vmem:[%s371 + $0x34] sm:$0xf]
        %v386 = vld [vmem:[%s371 + $0x38] sm:$0xf]
        %v387 = vld [vmem:[%s371 + $0x3c] sm:$0xf]
        %v404 = vunpack.c.l.b16 %v372
        %v405 = vunpack.c.l.b16 %v373
        %v406 = vunpack.c.l.b16 %v374
        %v407 = vunpack.c.l.b16 %v375
        %v408 = vunpack.c.l.b16 %v376
        %v409 = vunpack.c.l.b16 %v377
        %v410 = vunpack.c.l.b16 %v378
        %v411 = vunpack.c.l.b16 %v379
        %v412 = vunpack.c.l.b16 %v380
        %v413 = vunpack.c.l.b16 %v381
        %v414 = vunpack.c.l.b16 %v382
        %v415 = vunpack.c.l.b16 %v383
        %v416 = vunpack.c.l.b16 %v384
        %v417 = vunpack.c.l.b16 %v385
        %v418 = vunpack.c.l.b16 %v386
        %v419 = vunpack.c.l.b16 %v387
        %v420 = vpack.c.b16 %v405, %v404
        %v421 = vpack.c.b16 %v407, %v406
        %v422 = vpack.c.b16 %v409, %v408
        %v423 = vpack.c.b16 %v411, %v410
        %v424 = vpack.c.b16 %v413, %v412
        %v425 = vpack.c.b16 %v415, %v414
        %v426 = vpack.c.b16 %v417, %v416
        %v427 = vpack.c.b16 %v419, %v418
        %436 = vmatpush.bf16.msra.mxu0 %v427
        %437 = vmatpush.bf16.msra.mxu0 %v426
        %438 = vmatpush.bf16.msra.mxu0 %v425
        %439 = vmatpush.bf16.msra.mxu0 %v424
        %440 = vmatpush.bf16.msra.mxu0 %v423
        %441 = vmatpush.bf16.msra.mxu0 %v422
        %442 = vmatpush.bf16.msra.mxu0 %v421
        %443 = vmatpush.bf16.msra.mxu0 %v420
        %444 = vmatmul.bf16.gmra.mxu0 %v269
        %v445 = vpop.f32.mrf.mxu0
        %v446 = vadd.f32 0.0, %v445
        %v447 = vpop.f32.mrf.mxu0
        %448 = vdwg.mxu0
        %v449 = vpack.c.bf16 %v446, %v446
        %s450 = scalar_lea.vmem %s2, 2
        %v451 = vld [vmem:[%s450] sm:$0x3]
        %v453 = vsel %vm349, %v451, 0
        %v456 = vsel %vm353, %v449, 0
        %458 = vmatpush.bf16.msra.mxu0 0
        %459 = vmatpush.bf16.msra.mxu0 0
        %460 = vmatpush.bf16.msra.mxu0 0
        %461 = vmatpush.bf16.msra.mxu0 0
        %462 = vmatpush.bf16.msra.mxu0 0
        %463 = vmatpush.bf16.msra.mxu0 0
        %464 = vmatpush.bf16.msra.mxu0 0
        %465 = vmatpush.bf16.msra.mxu0 %v456
        %466 = vmatmul.bf16.gmra.mxu0 %v453
        %v467 = vpop.f32.mrf.mxu0
        %v468 = vadd.f32 0.0, %v467
        %v469 = vpop.f32.mrf.mxu0
        %470 = vdwg.mxu0
        %v471 = vadd.f32 %v370, %v468
        %s472 = scalar_lea.vmem [#allocation3], 128
        %v473 = vld [vmem:[%s472] sm:$0xf]
        %v474 = vld [vmem:[%s472 + $0x4] sm:$0xf]
        %v475 = vld [vmem:[%s472 + $0x8] sm:$0xf]
        %v476 = vld [vmem:[%s472 + $0xc] sm:$0xf]
        %v477 = vld [vmem:[%s472 + $0x10] sm:$0xf]
        %v478 = vld [vmem:[%s472 + $0x14] sm:$0xf]
        %v479 = vld [vmem:[%s472 + $0x18] sm:$0xf]
        %v480 = vld [vmem:[%s472 + $0x1c] sm:$0xf]
        %v481 = vld [vmem:[%s472 + $0x20] sm:$0xf]
        %v482 = vld [vmem:[%s472 + $0x24] sm:$0xf]
        %v483 = vld [vmem:[%s472 + $0x28] sm:$0xf]
        %v484 = vld [vmem:[%s472 + $0x2c] sm:$0xf]
        %v485 = vld [vmem:[%s472 + $0x30] sm:$0xf]
        %v486 = vld [vmem:[%s472 + $0x34] sm:$0xf]
        %v487 = vld [vmem:[%s472 + $0x38] sm:$0xf]
        %v488 = vld [vmem:[%s472 + $0x3c] sm:$0xf]
        %v505 = vunpack.c.l.b16 %v473
        %v506 = vunpack.c.l.b16 %v474
        %v507 = vunpack.c.l.b16 %v475
        %v508 = vunpack.c.l.b16 %v476
        %v509 = vunpack.c.l.b16 %v477
        %v510 = vunpack.c.l.b16 %v478
        %v511 = vunpack.c.l.b16 %v479
        %v512 = vunpack.c.l.b16 %v480
        %v513 = vunpack.c.l.b16 %v481
        %v514 = vunpack.c.l.b16 %v482
        %v515 = vunpack.c.l.b16 %v483
        %v516 = vunpack.c.l.b16 %v484
        %v517 = vunpack.c.l.b16 %v485
        %v518 = vunpack.c.l.b16 %v486
        %v519 = vunpack.c.l.b16 %v487
        %v520 = vunpack.c.l.b16 %v488
        %v521 = vpack.c.b16 %v506, %v505
        %v522 = vpack.c.b16 %v508, %v507
        %v523 = vpack.c.b16 %v510, %v509
        %v524 = vpack.c.b16 %v512, %v511
        %v525 = vpack.c.b16 %v514, %v513
        %v526 = vpack.c.b16 %v516, %v515
        %v527 = vpack.c.b16 %v518, %v517
        %v528 = vpack.c.b16 %v520, %v519
        %537 = vmatpush.bf16.msra.mxu0 %v528
        %538 = vmatpush.bf16.msra.mxu0 %v527
        %539 = vmatpush.bf16.msra.mxu0 %v526
        %540 = vmatpush.bf16.msra.mxu0 %v525
        %541 = vmatpush.bf16.msra.mxu0 %v524
        %542 = vmatpush.bf16.msra.mxu0 %v523
        %543 = vmatpush.bf16.msra.mxu0 %v522
        %544 = vmatpush.bf16.msra.mxu0 %v521
        %545 = vmatmul.bf16.gmra.mxu0 %v269
        %v546 = vpop.f32.mrf.mxu0
        %v547 = vadd.f32 0.0, %v546
        %v548 = vpop.f32.mrf.mxu0
        %549 = vdwg.mxu0
        %v550 = vpack.c.bf16 %v547, %v547
        %s551 = scalar_lea.vmem %s2, 4
        %v552 = vld [vmem:[%s551] sm:$0x3]
        %v554 = vsel %vm349, %v552, 0
        %v557 = vsel %vm353, %v550, 0
        %559 = vmatpush.bf16.msra.mxu0 0
        %560 = vmatpush.bf16.msra.mxu0 0
        %561 = vmatpush.bf16.msra.mxu0 0
        %562 = vmatpush.bf16.msra.mxu0 0
        %563 = vmatpush.bf16.msra.mxu0 0
        %564 = vmatpush.bf16.msra.mxu0 0
        %565 = vmatpush.bf16.msra.mxu0 0
        %566 = vmatpush.bf16.msra.mxu0 %v557
        %567 = vmatmul.bf16.gmra.mxu0 %v554
        %v568 = vpop.f32.mrf.mxu0
        %v569 = vadd.f32 0.0, %v568
        %v570 = vpop.f32.mrf.mxu0
        %571 = vdwg.mxu0
        %v572 = vadd.f32 %v471, %v569
        %v573 = vmax.f32 %v572, 0.0
        %v574 = vpack.c.bf16 %v573, %v573
        %575 = vst [vmem:[#allocation2 + $0x2] sm:$0x3] %v574
        %v576 = vunpack.c.l.bf16 %v269
        %578 = vset.pattern.permute.xlu0 0
        %579 = vperm.xlu0 %578, %v268
        %v580 = vpop.permute.xlu0 %579
        %v582 = vadd.f32 %v580, %v576
        %v583 = vld [vmem:[#allocation2] sm:$0xf]
        %v584 = vld [vmem:[%s4] sm:$0x3]
        %586 = vst [vmem:[#allocation1] ss:$4 sm:$0xff] %v583
        %v587 = vld.sshfl [vmem:[#allocation1] sm:$0xff pattern:$0x73625140]
        %v589 = vld.sshfl [vmem:[#allocation1 + $0x8] sm:$0xff pattern:$0x73625140]
        %591 = vrot.lane.b32.xlu0 %v587, 64
        %v592 = vpop.permute.xlu0 %591
        %593 = vrot.lane.b32.xlu0 %v589, 64
        %v594 = vpop.permute.xlu0 %593
        %vm595 = vcmask 523264
        %v596 = vsel %vm595, %v592, %v594
        %v598 = vsel %vm349, %v584, 0
        %v601 = vsel %vm353, %v596, 0
        %603 = vmatpush.bf16.msra.mxu0 0
        %604 = vmatpush.bf16.msra.mxu0 0
        %605 = vmatpush.bf16.msra.mxu0 0
        %606 = vmatpush.bf16.msra.mxu0 0
        %607 = vmatpush.bf16.msra.mxu0 0
        %608 = vmatpush.bf16.msra.mxu0 0
        %609 = vmatpush.bf16.msra.mxu0 0
        %610 = vmatpush.bf16.msra.mxu0 %v601
        %611 = vmatmul.bf16.gmra.mxu0 %v598
        %v612 = vpop.f32.mrf.mxu0
        %v613 = vadd.f32 0.0, %v612
        %v614 = vpop.f32.mrf.mxu0
        %615 = vdwg.mxu0
        %v616 = vadd.f32 %v582, %v613
        %v617 = vld [vmem:[#allocation2] sm:$0xf]
        %s618 = scalar_lea.vmem %s4, 2
        %v619 = vld [vmem:[%s618] sm:$0x3]
        %621 = vst [vmem:[#allocation1] ss:$4 sm:$0xff] %v617
        %v622 = vld.sshfl [vmem:[#allocation1] sm:$0xff pattern:$0x73625140]
        %v624 = vld.sshfl [vmem:[#allocation1 + $0x8] sm:$0xff pattern:$0x73625140]
        %626 = vrot.lane.b32.xlu0 %v622, 48
        %v627 = vpop.permute.xlu0 %626
        %628 = vrot.lane.b32.xlu0 %v624, 48
        %v629 = vpop.permute.xlu0 %628
        %vm630 = vcmask 392192
        %v631 = vsel %vm630, %v627, %v629
        %v633 = vsel %vm349, %v619, 0
        %v636 = vsel %vm353, %v631, 0
        %638 = vmatpush.bf16.msra.mxu0 0
        %639 = vmatpush.bf16.msra.mxu0 0
        %640 = vmatpush.bf16.msra.mxu0 0
        %641 = vmatpush.bf16.msra.mxu0 0
        %642 = vmatpush.bf16.msra.mxu0 0
        %643 = vmatpush.bf16.msra.mxu0 0
        %644 = vmatpush.bf16.msra.mxu0 0
        %645 = vmatpush.bf16.msra.mxu0 %v636
        %646 = vmatmul.bf16.gmra.mxu0 %v633
        %v647 = vpop.f32.mrf.mxu0
        %v648 = vadd.f32 0.0, %v647
        %v649 = vpop.f32.mrf.mxu0
        %650 = vdwg.mxu0
        %v651 = vadd.f32 %v616, %v648
        %v652 = vld [vmem:[#allocation2] sm:$0xf]
        %s653 = scalar_lea.vmem %s4, 4
        %v654 = vld [vmem:[%s653] sm:$0x3]
        %656 = vst [vmem:[#allocation1] ss:$4 sm:$0xff] %v652
        %v657 = vld.sshfl [vmem:[#allocation1] sm:$0xff pattern:$0x73625140]
        %v659 = vld.sshfl [vmem:[#allocation1 + $0x8] sm:$0xff pattern:$0x73625140]
        %661 = vrot.lane.b32.xlu0 %v657, 32
        %v662 = vpop.permute.xlu0 %661
        %663 = vrot.lane.b32.xlu0 %v659, 32
        %v664 = vpop.permute.xlu0 %663
        %vm665 = vcmask 261120
        %v666 = vsel %vm665, %v662, %v664
        %v668 = vsel %vm349, %v654, 0
        %v671 = vsel %vm353, %v666, 0
        %673 = vmatpush.bf16.msra.mxu0 0
        %674 = vmatpush.bf16.msra.mxu0 0
        %675 = vmatpush.bf16.msra.mxu0 0
        %676 = vmatpush.bf16.msra.mxu0 0
        %677 = vmatpush.bf16.msra.mxu0 0
        %678 = vmatpush.bf16.msra.mxu0 0
        %679 = vmatpush.bf16.msra.mxu0 0
        %680 = vmatpush.bf16.msra.mxu0 %v671
        %681 = vmatmul.bf16.gmra.mxu0 %v668
        %v682 = vpop.f32.mrf.mxu0
        %v683 = vadd.f32 0.0, %v682
        %v684 = vpop.f32.mrf.mxu0
        %685 = vdwg.mxu0
        %v686 = vadd.f32 %v651, %v683
        %v687 = vld [vmem:[#allocation2] sm:$0xf]
        %s688 = scalar_lea.vmem %s4, 6
        %v689 = vld [vmem:[%s688] sm:$0x3]
        %691 = vst [vmem:[#allocation1] ss:$4 sm:$0xff] %v687
        %v692 = vld.sshfl [vmem:[#allocation1] sm:$0xff pattern:$0x73625140]
        %v694 = vld.sshfl [vmem:[#allocation1 + $0x8] sm:$0xff pattern:$0x73625140]
        %696 = vrot.lane.b32.xlu0 %v692, 16
        %v697 = vpop.permute.xlu0 %696
        %698 = vrot.lane.b32.xlu0 %v694, 16
        %v699 = vpop.permute.xlu0 %698
        %vm700 = vcmask 130048
        %v701 = vsel %vm700, %v697, %v699
        %v703 = vsel %vm349, %v689, 0
        %v706 = vsel %vm353, %v701, 0
        %708 = vmatpush.bf16.msra.mxu0 0
        %709 = vmatpush.bf16.msra.mxu0 0
        %710 = vmatpush.bf16.msra.mxu0 0
        %711 = vmatpush.bf16.msra.mxu0 0
        %712 = vmatpush.bf16.msra.mxu0 0
        %713 = vmatpush.bf16.msra.mxu0 0
        %714 = vmatpush.bf16.msra.mxu0 0
        %715 = vmatpush.bf16.msra.mxu0 %v706
        %716 = vmatmul.bf16.gmra.mxu0 %v703
        %v717 = vpop.f32.mrf.mxu0
        %v718 = vadd.f32 0.0, %v717
        %v719 = vpop.f32.mrf.mxu0
        %720 = vdwg.mxu0
        %v721 = vadd.f32 %v686, %v718
        %v722 = vld [vmem:[#allocation2 + $0x2] sm:$0x3]
        %s723 = scalar_lea.vmem %s4, 8
        %v724 = vld [vmem:[%s723] sm:$0x3]
        %v726 = vsel %vm349, %v724, 0
        %v729 = vsel %vm353, %v722, 0
        %731 = vmatpush.bf16.msra.mxu0 0
        %732 = vmatpush.bf16.msra.mxu0 0
        %733 = vmatpush.bf16.msra.mxu0 0
        %734 = vmatpush.bf16.msra.mxu0 0
        %735 = vmatpush.bf16.msra.mxu0 0
        %736 = vmatpush.bf16.msra.mxu0 0
        %737 = vmatpush.bf16.msra.mxu0 0
        %738 = vmatpush.bf16.msra.mxu0 %v729
        %739 = vmatmul.bf16.gmra.mxu0 %v726
        %v740 = vpop.f32.mrf.mxu0
        %v741 = vadd.f32 0.0, %v740
        %v742 = vpop.f32.mrf.mxu0
        %743 = vdwg.mxu0
        %v744 = vadd.f32 %v721, %v741
        %v745 = vld [vmem:[#allocation2 + $0x2] sm:$0xf]
        %s746 = scalar_lea.vmem %s4, 10
        %v747 = vld [vmem:[%s746] sm:$0x3]
        %749 = vst [vmem:[#allocation1] ss:$4 sm:$0xff] %v745
        %v750 = vld.sshfl [vmem:[#allocation1] sm:$0xff pattern:$0x73625140]
        %v752 = vld.sshfl [vmem:[#allocation1 + $0x8] sm:$0xff pattern:$0x73625140]
        %754 = vrot.lane.b32.xlu0 %v750, 112
        %v755 = vpop.permute.xlu0 %754
        %756 = vrot.lane.b32.xlu0 %v752, 112
        %v757 = vpop.permute.xlu0 %756
        %vm758 = vcmask 916480
        %v759 = vsel %vm758, %v755, %v757
        %v761 = vsel %vm349, %v747, 0
        %v764 = vsel %vm353, %v759, 0
        %766 = vmatpush.bf16.msra.mxu0 0
        %767 = vmatpush.bf16.msra.mxu0 0
        %768 = vmatpush.bf16.msra.mxu0 0
        %769 = vmatpush.bf16.msra.mxu0 0
        %770 = vmatpush.bf16.msra.mxu0 0
        %771 = vmatpush.bf16.msra.mxu0 0
        %772 = vmatpush.bf16.msra.mxu0 0
        %773 = vmatpush.bf16.msra.mxu0 %v764
        %774 = vmatmul.bf16.gmra.mxu0 %v761
        %v775 = vpop.f32.mrf.mxu0
        %v776 = vadd.f32 0.0, %v775
        %v777 = vpop.f32.mrf.mxu0
        %778 = vdwg.mxu0
        %v779 = vadd.f32 %v744, %v776
        %v780 = vld [vmem:[#allocation2 + $0x2] sm:$0xf]
        %s781 = scalar_lea.vmem %s4, 12
        %v782 = vld [vmem:[%s781] sm:$0x3]
        %784 = vst [vmem:[#allocation1] ss:$4 sm:$0xff] %v780
        %v785 = vld.sshfl [vmem:[#allocation1] sm:$0xff pattern:$0x73625140]
        %v787 = vld.sshfl [vmem:[#allocation1 + $0x8] sm:$0xff pattern:$0x73625140]
        %789 = vrot.lane.b32.xlu0 %v785, 96
        %v790 = vpop.permute.xlu0 %789
        %791 = vrot.lane.b32.xlu0 %v787, 96
        %v792 = vpop.permute.xlu0 %791
        %vm793 = vcmask 785408
        %v794 = vsel %vm793, %v790, %v792
        %v796 = vsel %vm349, %v782, 0
        %v799 = vsel %vm353, %v794, 0
        %801 = vmatpush.bf16.msra.mxu0 0
        %802 = vmatpush.bf16.msra.mxu0 0
        %803 = vmatpush.bf16.msra.mxu0 0
        %804 = vmatpush.bf16.msra.mxu0 0
        %805 = vmatpush.bf16.msra.mxu0 0
        %806 = vmatpush.bf16.msra.mxu0 0
        %807 = vmatpush.bf16.msra.mxu0 0
        %808 = vmatpush.bf16.msra.mxu0 %v799
        %809 = vmatmul.bf16.gmra.mxu0 %v796
        %v810 = vpop.f32.mrf.mxu0
        %v811 = vadd.f32 0.0, %v810
        %v812 = vpop.f32.mrf.mxu0
        %813 = vdwg.mxu0
        %v814 = vadd.f32 %v779, %v811
        %v815 = vld [vmem:[#allocation2 + $0x2] sm:$0xf]
        %s816 = scalar_lea.vmem %s4, 14
        %v817 = vld [vmem:[%s816] sm:$0x3]
        %819 = vst [vmem:[#allocation1] ss:$4 sm:$0xff] %v815
        %v820 = vld.sshfl [vmem:[#allocation1] sm:$0xff pattern:$0x73625140]
        %v822 = vld.sshfl [vmem:[#allocation1 + $0x8] sm:$0xff pattern:$0x73625140]
        %824 = vrot.lane.b32.xlu0 %v820, 80
        %v825 = vpop.permute.xlu0 %824
        %826 = vrot.lane.b32.xlu0 %v822, 80
        %v827 = vpop.permute.xlu0 %826
        %vm828 = vcmask 654336
        %v829 = vsel %vm828, %v825, %v827
        %v831 = vsel %vm349, %v817, 0
        %v834 = vsel %vm353, %v829, 0
        %836 = vmatpush.bf16.msra.mxu0 0
        %837 = vmatpush.bf16.msra.mxu0 0
        %838 = vmatpush.bf16.msra.mxu0 0
        %839 = vmatpush.bf16.msra.mxu0 0
        %840 = vmatpush.bf16.msra.mxu0 0
        %841 = vmatpush.bf16.msra.mxu0 0
        %842 = vmatpush.bf16.msra.mxu0 0
        %843 = vmatpush.bf16.msra.mxu0 %v834
        %844 = vmatmul.bf16.gmra.mxu0 %v831
        %v845 = vpop.f32.mrf.mxu0
        %v846 = vadd.f32 0.0, %v845
        %v847 = vpop.f32.mrf.mxu0
        %848 = vdwg.mxu0
        %v849 = vadd.f32 %v814, %v846
        %v850 = vld [vmem:[#allocation2 + $0x2] sm:$0xf]
        %s851 = scalar_lea.vmem %s4, 16
        %v852 = vld [vmem:[%s851] sm:$0x3]
        %854 = vst [vmem:[#allocation1] ss:$4 sm:$0xff] %v850
        %v855 = vld.sshfl [vmem:[#allocation1] sm:$0xff pattern:$0x73625140]
        %v857 = vld.sshfl [vmem:[#allocation1 + $0x8] sm:$0xff pattern:$0x73625140]
        %859 = vrot.lane.b32.xlu0 %v855, 64
        %v860 = vpop.permute.xlu0 %859
        %861 = vrot.lane.b32.xlu0 %v857, 64
        %v862 = vpop.permute.xlu0 %861
        %v863 = vsel %vm595, %v860, %v862
        %v865 = vsel %vm349, %v852, 0
        %v868 = vsel %vm353, %v863, 0
        %870 = vmatpush.bf16.msra.mxu0 0
        %871 = vmatpush.bf16.msra.mxu0 0
        %872 = vmatpush.bf16.msra.mxu0 0
        %873 = vmatpush.bf16.msra.mxu0 0
        %874 = vmatpush.bf16.msra.mxu0 0
        %875 = vmatpush.bf16.msra.mxu0 0
        %876 = vmatpush.bf16.msra.mxu0 0
        %877 = vmatpush.bf16.msra.mxu0 %v868
        %878 = vmatmul.bf16.gmra.mxu0 %v865
        %v879 = vpop.f32.mrf.mxu0
        %v880 = vadd.f32 0.0, %v879
        %v881 = vpop.f32.mrf.mxu0
        %882 = vdwg.mxu0
        %v883 = vadd.f32 %v849, %v880
        %v884 = vmax.f32 %v883, 0.0
        %v885 = vpack.c.bf16 %v884, %v884
        %886 = vst [vmem:[%s259] sm:$0x3] %v885
        %s887 = sand.u32 %s160, 1
        %s888 = scalar_lea.sflag [#allocation5], %s887
        %s889 = sand.u32 %s160, 1
        %s890 = smul.addr %s889, 2
        %s891 = scalar_lea.vmem [#allocation6], %s890
        // Predicated region
        $region49: #{tpu_custom_call.1} parent=43 // pred_check
          %p892 = pneg %p170
        $region50: #{tpu_custom_call.1} parent=43 // pred_check_branch
          %894 = sbr.rel (%p892) target = $region52
        $region51: #{tpu_custom_call.1} parent=43 // pred_region
          %896 = vsyncadd %s888, 0
          %s897 = smul.addr %s21, 2
          %s898 = scalar_lea.hbm %s6, %s897
          %s900 = sshll.u32 %s891, 4
          %s901 = int_to_ptr.vmem [resolvable:$true] %s900
          %s902 = sshll.u32 %s898, 4
          %s903 = int_to_ptr.hbm [resolvable:$true] %s902
          %905 = dma.vmem_to_hbm [thread:$0]  %s901, 32, %s903, %s888
        $region52: #{tpu_custom_call.1} parent=43 // pred_fallthru
          _
      $region44: #{tpu_custom_call.1} parent=5 // pred_fallthru
        _
      %p906 = scmp.le.s32.totalorder 2, %s16
      // Predicated region
      $region53: #{tpu_custom_call.1} parent=5 // pred_check
        %p907 = pneg %p906
      $region54: #{tpu_custom_call.1} parent=5 // pred_check_branch
        %909 = sbr.rel (%p907) target = $region56
      $region55: #{tpu_custom_call.1} parent=5 // pred_region
        %s910 = ssub.s32 %s16, 2
        // Predicated region
        $region57: #{tpu_custom_call.1} parent=55 // pred_check
          %p911 = pneg %p176
        $region58: #{tpu_custom_call.1} parent=55 // pred_check_branch
          %913 = sbr.rel (%p911) target = $region60
        $region59: #{tpu_custom_call.1} parent=55 // pred_region
          %s914 = sand.u32 %s161, 1
          %s915 = scalar_lea.sflag [#allocation5], %s914
          %s916 = sand.u32 %s161, 1
          %s917 = smul.addr %s916, 2
          %s918 = scalar_lea.vmem [#allocation6], %s917
          %920 = dma.done %s915, 32
        $region60: #{tpu_custom_call.1} parent=55 // pred_fallthru
          _
      $region56: #{tpu_custom_call.1} parent=5 // pred_fallthru
        _
    $region6: #{tpu_custom_call.1} parent=1 // loop_footer
      %s20 = sadd.s32 1, %s16
    $region7: #{tpu_custom_call.1} parent=1 // loop_footer_branch
      %15 = sbr.rel target = $region3
    $region8: #{tpu_custom_call.1} parent=1 // loop_exit
      _
    %921 = vsyncpa [#allocation4], 1
    %s922 = scalar_lea.sflag [#allocation4], 1
    %923 = vsyncpa %s922, 1
    %924 = vsyncpa [#allocation5], 1
    %s925 = scalar_lea.sflag [#allocation5], 1
    %926 = vsyncpa %s925, 1

</llo_original>
